<compile_context>
chip_gen: v6e
topology: v6e:2x2x1
jax: 0.10.0
libtpu: 0.0.40
codegen_flags: <defaults>
</compile_context>

<pallas_src>
import jax
import jax.numpy as jnp
from jax.experimental import pallas as pl
from jax.experimental.pallas import tpu as pltpu

_IN = 784        # flattened 28*28 input features (unpadded; == full array dim)
_HID_PAD = 128   # fc3 output padded 64 -> 128 (zero pad, lane-dense)
_OUT_PAD = 128   # lane-dense class slab; real classes are [:, :10]
_NEG = -1e30     # pad-class bias -> exp() == 0 under log_softmax


def _mlp_kernel(x_ref, w1_ref, b1_ref, w2_ref, b2_ref, w3_ref, b3_ref,
                w4_ref, b4_ref, o_ref):
    """One batch tile: fc1->relu->fc2->relu->fc3->relu->fc4->log_softmax."""
    x = x_ref[...]                                                   # (TB, 784) bf16

    h1 = jnp.dot(x, w1_ref[...], preferred_element_type=jnp.float32)
    h1 = jnp.maximum(h1 + b1_ref[...], 0.0)                          # (TB, 256) f32

    h2 = jnp.dot(h1.astype(jnp.bfloat16), w2_ref[...],
                 preferred_element_type=jnp.float32)
    h2 = jnp.maximum(h2 + b2_ref[...], 0.0)                          # (TB, 128) f32

    h3 = jnp.dot(h2.astype(jnp.bfloat16), w3_ref[...],
                 preferred_element_type=jnp.float32)
    h3 = jnp.maximum(h3 + b3_ref[...], 0.0)                          # (TB, 128) f32
    # Padded fc3 columns see zero weights + zero bias -> stay exactly 0.

    logits = jnp.dot(h3.astype(jnp.bfloat16), w4_ref[...],
                     preferred_element_type=jnp.float32)
    logits = logits + b4_ref[...]                                    # (TB, 128) f32
    # Padded classes carry bias -1e30 -> contribute exp(~-inf)=0 to the sum,
    # so log_softmax over the real 10 classes is unchanged.

    m = jnp.max(logits, axis=1, keepdims=True)
    shifted = logits - m
    lse = jnp.log(jnp.sum(jnp.exp(shifted), axis=1, keepdims=True))
    o_ref[...] = (shifted - lse).astype(o_ref.dtype)                 # bf16 writeback


def _round_up(n, m):
    return ((n + m - 1) // m) * m


def _cdiv(a, b):
    return -(-a // b)


@jax.jit
def classifier_forward(x, params):
    """x: (B, 1, 28, 28) NCHW. Returns (B, 10) f32 log-probabilities."""
    b = x.shape[0]
    w1, b1, w2, b2, w3, b3, w4, b4 = params

    # Single fused pass over x: flatten like x.view(B, -1) and cast to bf16.
    # No feature padding in HBM (saves the extra read/write passes + 12.5% bytes).
    x2d = x.reshape(b, -1).astype(jnp.bfloat16)                      # (B, 784)

    # Adaptive batch tile: cap 2048 rows (footprint well under scoped VMEM on
    # v5e/v6e and v7x's 64 MiB physical); keep >=2 grid steps for large batches
    # so the parallel axis shards across v7x's two TensorCores; round the tile
    # to 8 sublanes so batch-pad waste stays below one row-group.
    cap = 2048
    n_steps = max(1, _cdiv(b, cap))
    if b > 1024 and n_steps < 2:
        n_steps = 2
    tb = _round_up(_cdiv(b, n_steps), 8)
    bp = tb * n_steps
    xp = jnp.pad(x2d, ((0, bp - b), (0, 0))) if bp != b else x2d

    # bf16 weights (f32 accumulation in-kernel). Lane-densify the tiny fc3/fc4
    # path: pad w3/b3 N dim and w4 K dim 64 -> 128 with zeros (bit-identical),
    # pad w4 N dim 10 -> 128 (zero weights, -1e30 bias on pad classes).
    w1p = w1.astype(jnp.bfloat16)                                    # (784, 256)
    w2p = w2.astype(jnp.bfloat16)                                    # (256, 128)
    w3p = jnp.pad(w3, ((0, 0), (0, _HID_PAD - w3.shape[1]))
                  ).astype(jnp.bfloat16)                             # (128, 128)
    w4p = jnp.pad(w4, ((0, _HID_PAD - w4.shape[0]),
                       (0, _OUT_PAD - w4.shape[1]))
                  ).astype(jnp.bfloat16)                             # (128, 128)
    b1f = b1.astype(jnp.float32)                                     # (1, 256)
    b2f = b2.astype(jnp.float32)                                     # (1, 128)
    b3p = jnp.pad(b3.astype(jnp.float32),
                  ((0, 0), (0, _HID_PAD - b3.shape[1])))             # (1, 128) zeros
    b4p = jnp.pad(b4.astype(jnp.float32),
                  ((0, 0), (0, _OUT_PAD - b4.shape[1])),
                  constant_values=_NEG)                              # (1, 128) -1e30 pad

    grid = (bp // tb,)

    def const(shape):
        # Constant index_map -> VMEM-resident across grid steps.
        return pl.BlockSpec(shape, lambda i: (0, 0))

    flops = 2 * bp * (_IN * 256 + 256 * 128 + 128 * _HID_PAD + _HID_PAD * _OUT_PAD)
    bytes_accessed = (xp.size * 2 + bp * _OUT_PAD * 2
                      + (w1p.size + w2p.size + w3p.size + w4p.size) * 2
                      + (b1f.size + b2f.size + b3p.size + b4p.size) * 4)

    out = pl.pallas_call(
        _mlp_kernel,
        out_shape=jax.ShapeDtypeStruct((bp, _OUT_PAD), jnp.bfloat16),
        grid_spec=pltpu.PrefetchScalarGridSpec(
            num_scalar_prefetch=0,
            grid=grid,
            in_specs=[
                pl.BlockSpec((tb, _IN), lambda i: (i, 0)),        # x tile (streamed)
                const((_IN, 256)),          const((1, 256)),      # fc1 (resident)
                const((256, 128)),          const((1, 128)),      # fc2
                const((128, _HID_PAD)),     const((1, _HID_PAD)), # fc3 (padded N)
                const((_HID_PAD, _OUT_PAD)), const((1, _OUT_PAD)),# fc4 (padded K/N)
            ],
            out_specs=pl.BlockSpec((tb, _OUT_PAD), lambda i: (i, 0)),
        ),
        compiler_params=pltpu.CompilerParams(
            dimension_semantics=("parallel",),        # v7x: shard batch over 2 TCs
            vmem_limit_bytes=32 * 1024 * 1024,
        ),
        cost_estimate=pl.CostEstimate(
            flops=flops,
            transcendentals=bp * (_OUT_PAD + 1),
            bytes_accessed=bytes_accessed,
        ),
    )(xp, w1p, b1f, w2p, b2f, w3p, b3p, w4p, b4p)

    # Slice off batch/class padding; return f32 log-probs (tiny (b,10) copy).
    return out[:b, :10].astype(jnp.float32)


def init_params(key):
    """Deterministic init matching nn.Linear shapes (weights stored (in, out))."""
    dims = [784, 256, 128, 64, 10]
    params = []
    for i in range(4):
        key, kw, kb = jax.random.split(key, 3)
        fan_in = dims[i]
        bound = 1.0 / (fan_in ** 0.5)
        w = jax.random.uniform(kw, (dims[i], dims[i + 1]),
                               minval=-bound, maxval=bound, dtype=jnp.float32)
        bia = jax.random.uniform(kb, (1, dims[i + 1]),
                                 minval=-bound, maxval=bound, dtype=jnp.float32)
        params.append(w)
        params.append(bia)
    return tuple(params)


if __name__ == "__main__":
    key = jax.random.PRNGKey(0)
    key_x, key_p = jax.random.split(key)

    # Small FashionMNIST-like batch: (B, 1, 28, 28) NCHW.
    x = jax.random.normal(key_x, (8, 1, 28, 28), dtype=jnp.float32)
    params = init_params(key_p)

    out = classifier_forward(x, params)
    jax.block_until_ready(out)

    # Sanity: log_softmax rows must sum to ~1 in prob space (bf16 storage of the
    # log-probs limits precision to ~0.5% relative).
    row_sums = jnp.sum(jnp.exp(out), axis=1)
    assert out.shape == (8, 10)
    assert bool(jnp.all(jnp.abs(row_sums - 1.0) < 2e-2))
    assert bool(jnp.all(jnp.isfinite(out)))

    print("KERNEL_OK")
</pallas_src>

<mosaic_0001>
module attributes {stable_mosaic.version = 11 : i64} {
  func.func @_mlp_kernel(%arg0: i32, %arg1: memref<8x784xbf16, #tpu.memory_space<vmem>>, %arg2: memref<784x256xbf16, #tpu.memory_space<vmem>>, %arg3: memref<1x256xf32, #tpu.memory_space<vmem>>, %arg4: memref<256x128xbf16, #tpu.memory_space<vmem>>, %arg5: memref<1x128xf32, #tpu.memory_space<vmem>>, %arg6: memref<128x128xbf16, #tpu.memory_space<vmem>>, %arg7: memref<1x128xf32, #tpu.memory_space<vmem>>, %arg8: memref<128x128xbf16, #tpu.memory_space<vmem>>, %arg9: memref<1x128xf32, #tpu.memory_space<vmem>>, %arg10: memref<8x128xbf16, #tpu.memory_space<vmem>>) attributes {dimension_semantics = [#tpu.dimension_semantics<parallel>], iteration_bounds = array<i64: 1>, scalar_prefetch = 0 : i64, scratch_operands = 0 : i64, tpu.core_type = #tpu.core_type<tc>, window_params = [{transform_indices = @transform_0, window_bounds = array<i64: 8, 784>}, {pipeline_mode = #tpu.pipeline_mode<synchronous>, transform_indices = @transform_1, window_bounds = array<i64: 784, 256>}, {pipeline_mode = #tpu.pipeline_mode<synchronous>, transform_indices = @transform_2, window_bounds = array<i64: 1, 256>}, {pipeline_mode = #tpu.pipeline_mode<synchronous>, transform_indices = @transform_3, window_bounds = array<i64: 256, 128>}, {pipeline_mode = #tpu.pipeline_mode<synchronous>, transform_indices = @transform_4, window_bounds = array<i64: 1, 128>}, {pipeline_mode = #tpu.pipeline_mode<synchronous>, transform_indices = @transform_5, window_bounds = array<i64: 128, 128>}, {pipeline_mode = #tpu.pipeline_mode<synchronous>, transform_indices = @transform_6, window_bounds = array<i64: 1, 128>}, {pipeline_mode = #tpu.pipeline_mode<synchronous>, transform_indices = @transform_7, window_bounds = array<i64: 128, 128>}, {pipeline_mode = #tpu.pipeline_mode<synchronous>, transform_indices = @transform_8, window_bounds = array<i64: 1, 128>}, {transform_indices = @transform_9, window_bounds = array<i64: 8, 128>}]} {
    %c0 = arith.constant 0 : index
    %c0_0 = arith.constant 0 : index
    %0 = vector.load %arg1[%c0, %c0_0] : memref<8x784xbf16, #tpu.memory_space<vmem>>, vector<8x784xbf16>
    %c0_1 = arith.constant 0 : index
    %c0_2 = arith.constant 0 : index
    %1 = vector.load %arg2[%c0_1, %c0_2] : memref<784x256xbf16, #tpu.memory_space<vmem>>, vector<784x256xbf16>
    %cst = arith.constant dense<0.000000e+00> : vector<8x256xf32>
    %2 = tpu.matmul %0, %1, %cst {dimension_numbers = #tpu.dot_dimension_numbers<[1], [0], [0], [1], [0, 0, 1, 1], [], []>} : vector<8x784xbf16>, vector<784x256xbf16>, vector<8x256xf32> -> vector<8x256xf32>
    %c0_3 = arith.constant 0 : index
    %c0_4 = arith.constant 0 : index
    %3 = vector.load %arg3[%c0_3, %c0_4] : memref<1x256xf32, #tpu.memory_space<vmem>>, vector<1x256xf32>
    %4 = vector.broadcast %3 : vector<1x256xf32> to vector<8x256xf32>
    %5 = arith.addf %2, %4 : vector<8x256xf32>
    %cst_5 = arith.constant 0.000000e+00 : f32
    %6 = vector.broadcast %cst_5 : f32 to vector<8x256xf32>
    %7 = arith.maximumf %5, %6 : vector<8x256xf32>
    %8 = arith.truncf %7 : vector<8x256xf32> to vector<8x256xbf16>
    %c0_6 = arith.constant 0 : index
    %c0_7 = arith.constant 0 : index
    %9 = vector.load %arg4[%c0_6, %c0_7] : memref<256x128xbf16, #tpu.memory_space<vmem>>, vector<256x128xbf16>
    %cst_8 = arith.constant dense<0.000000e+00> : vector<8x128xf32>
    %10 = tpu.matmul %8, %9, %cst_8 {dimension_numbers = #tpu.dot_dimension_numbers<[1], [0], [0], [1], [0, 0, 1, 1], [], []>} : vector<8x256xbf16>, vector<256x128xbf16>, vector<8x128xf32> -> vector<8x128xf32>
    %c0_9 = arith.constant 0 : index
    %c0_10 = arith.constant 0 : index
    %11 = vector.load %arg5[%c0_9, %c0_10] : memref<1x128xf32, #tpu.memory_space<vmem>>, vector<1x128xf32>
    %12 = vector.broadcast %11 : vector<1x128xf32> to vector<8x128xf32>
    %13 = arith.addf %10, %12 : vector<8x128xf32>
    %cst_11 = arith.constant 0.000000e+00 : f32
    %14 = vector.broadcast %cst_11 : f32 to vector<8x128xf32>
    %15 = arith.maximumf %13, %14 : vector<8x128xf32>
    %16 = arith.truncf %15 : vector<8x128xf32> to vector<8x128xbf16>
    %c0_12 = arith.constant 0 : index
    %c0_13 = arith.constant 0 : index
    %17 = vector.load %arg6[%c0_12, %c0_13] : memref<128x128xbf16, #tpu.memory_space<vmem>>, vector<128x128xbf16>
    %cst_14 = arith.constant dense<0.000000e+00> : vector<8x128xf32>
    %18 = tpu.matmul %16, %17, %cst_14 {dimension_numbers = #tpu.dot_dimension_numbers<[1], [0], [0], [1], [0, 0, 1, 1], [], []>} : vector<8x128xbf16>, vector<128x128xbf16>, vector<8x128xf32> -> vector<8x128xf32>
    %c0_15 = arith.constant 0 : index
    %c0_16 = arith.constant 0 : index
    %19 = vector.load %arg7[%c0_15, %c0_16] : memref<1x128xf32, #tpu.memory_space<vmem>>, vector<1x128xf32>
    %20 = vector.broadcast %19 : vector<1x128xf32> to vector<8x128xf32>
    %21 = arith.addf %18, %20 : vector<8x128xf32>
    %cst_17 = arith.constant 0.000000e+00 : f32
    %22 = vector.broadcast %cst_17 : f32 to vector<8x128xf32>
    %23 = arith.maximumf %21, %22 : vector<8x128xf32>
    %24 = arith.truncf %23 : vector<8x128xf32> to vector<8x128xbf16>
    %c0_18 = arith.constant 0 : index
    %c0_19 = arith.constant 0 : index
    %25 = vector.load %arg8[%c0_18, %c0_19] : memref<128x128xbf16, #tpu.memory_space<vmem>>, vector<128x128xbf16>
    %cst_20 = arith.constant dense<0.000000e+00> : vector<8x128xf32>
    %26 = tpu.matmul %24, %25, %cst_20 {dimension_numbers = #tpu.dot_dimension_numbers<[1], [0], [0], [1], [0, 0, 1, 1], [], []>} : vector<8x128xbf16>, vector<128x128xbf16>, vector<8x128xf32> -> vector<8x128xf32>
    %c0_21 = arith.constant 0 : index
    %c0_22 = arith.constant 0 : index
    %27 = vector.load %arg9[%c0_21, %c0_22] : memref<1x128xf32, #tpu.memory_space<vmem>>, vector<1x128xf32>
    %28 = vector.broadcast %27 : vector<1x128xf32> to vector<8x128xf32>
    %29 = arith.addf %26, %28 : vector<8x128xf32>
    %cst_23 = arith.constant dense<0xFF800000> : vector<8xf32>
    %30 = vector.multi_reduction <maximumf>, %29, %cst_23 [1] : vector<8x128xf32> to vector<8xf32>
    %31 = vector.shape_cast %30 : vector<8xf32> to vector<8x1xf32>
    %32 = vector.broadcast %31 : vector<8x1xf32> to vector<8x128xf32>
    %33 = arith.subf %29, %32 : vector<8x128xf32>
    %34 = math.exp %33 : vector<8x128xf32>
    %cst_24 = arith.constant dense<0.000000e+00> : vector<8xf32>
    %35 = vector.multi_reduction <add>, %34, %cst_24 [1] : vector<8x128xf32> to vector<8xf32>
    %36 = vector.shape_cast %35 : vector<8xf32> to vector<8x1xf32>
    %37 = math.log %36 : vector<8x1xf32>
    %38 = vector.broadcast %37 : vector<8x1xf32> to vector<8x128xf32>
    %39 = arith.subf %33, %38 : vector<8x128xf32>
    %40 = arith.truncf %39 : vector<8x128xf32> to vector<8x128xbf16>
    %c0_25 = arith.constant 0 : index
    %c0_26 = arith.constant 0 : index
    %41 = vector.load %arg10[%c0_25, %c0_26] : memref<8x128xbf16, #tpu.memory_space<vmem>>, vector<8x128xbf16>
    tpu.vector_store %arg10[%c0_25, %c0_26], %40 {strides = array<i32>} : memref<8x128xbf16, #tpu.memory_space<vmem>>, vector<8x128xbf16>,
    return
  }
  func.func @transform_0(%arg0: i32) -> (i32, i32) {
    %c0_i32 = arith.constant 0 : i32
    %c0_i32_0 = arith.constant 0 : i32
    return %arg0, %c0_i32 : i32, i32
  }
  func.func @transform_1(%arg0: i32) -> (i32, i32) {
    %c0_i32 = arith.constant 0 : i32
    %c0_i32_0 = arith.constant 0 : i32
    %c0_i32_1 = arith.constant 0 : i32
    return %c0_i32, %c0_i32_0 : i32, i32
  }
  func.func @transform_2(%arg0: i32) -> (i32, i32) {
    %c0_i32 = arith.constant 0 : i32
    %c0_i32_0 = arith.constant 0 : i32
    %c0_i32_1 = arith.constant 0 : i32
    return %c0_i32, %c0_i32_0 : i32, i32
  }
  func.func @transform_3(%arg0: i32) -> (i32, i32) {
    %c0_i32 = arith.constant 0 : i32
    %c0_i32_0 = arith.constant 0 : i32
    %c0_i32_1 = arith.constant 0 : i32
    return %c0_i32, %c0_i32_0 : i32, i32
  }
  func.func @transform_4(%arg0: i32) -> (i32, i32) {
    %c0_i32 = arith.constant 0 : i32
    %c0_i32_0 = arith.constant 0 : i32
    %c0_i32_1 = arith.constant 0 : i32
    return %c0_i32, %c0_i32_0 : i32, i32
  }
  func.func @transform_5(%arg0: i32) -> (i32, i32) {
    %c0_i32 = arith.constant 0 : i32
    %c0_i32_0 = arith.constant 0 : i32
    %c0_i32_1 = arith.constant 0 : i32
    return %c0_i32, %c0_i32_0 : i32, i32
  }
  func.func @transform_6(%arg0: i32) -> (i32, i32) {
    %c0_i32 = arith.constant 0 : i32
    %c0_i32_0 = arith.constant 0 : i32
    %c0_i32_1 = arith.constant 0 : i32
    return %c0_i32, %c0_i32_0 : i32, i32
  }
  func.func @transform_7(%arg0: i32) -> (i32, i32) {
    %c0_i32 = arith.constant 0 : i32
    %c0_i32_0 = arith.constant 0 : i32
    %c0_i32_1 = arith.constant 0 : i32
    return %c0_i32, %c0_i32_0 : i32, i32
  }
  func.func @transform_8(%arg0: i32) -> (i32, i32) {
    %c0_i32 = arith.constant 0 : i32
    %c0_i32_0 = arith.constant 0 : i32
    %c0_i32_1 = arith.constant 0 : i32
    return %c0_i32, %c0_i32_0 : i32, i32
  }
  func.func @transform_9(%arg0: i32) -> (i32, i32) {
    %c0_i32 = arith.constant 0 : i32
    %c0_i32_0 = arith.constant 0 : i32
    return %arg0, %c0_i32 : i32, i32
  }
}

</mosaic_0001>

<llo_original>
// kernel: classifier_forward.1
$region0: #{classifier_forward.1}
  #allocation0 [shape = 'u32[]', space=smem, size = 0x4, offset = 0x4, fixed_abs, tag = 'smem constant byte address 0x4 - core index']
  #allocation1 [shape = 'u32[144,128]{1,0:T(1,128)}', space=vmem, size = 0x12000, scoped, tag = 'internal scratch']
  %s0 = inlined_call_operand.vmem [shape: bf16[8,784], index: 0, kind: input, shape index: {}]
  %s1 = inlined_call_operand.vmem [shape: bf16[784,256], index: 1, kind: input, shape index: {}]
  %s2 = inlined_call_operand.vmem [shape: f32[1,256], index: 2, kind: input, shape index: {}]
  %s3 = inlined_call_operand.vmem [shape: bf16[256,128], index: 3, kind: input, shape index: {}]
  %s4 = inlined_call_operand.vmem [shape: f32[1,128], index: 4, kind: input, shape index: {}]
  %s5 = inlined_call_operand.vmem [shape: bf16[128,128], index: 5, kind: input, shape index: {}]
  %s6 = inlined_call_operand.vmem [shape: f32[1,128], index: 6, kind: input, shape index: {}]
  %s7 = inlined_call_operand.vmem [shape: bf16[128,128], index: 7, kind: input, shape index: {}]
  %s8 = inlined_call_operand.vmem [shape: f32[1,128], index: 8, kind: input, shape index: {}]
  %s9 = inlined_call_operand.vmem [shape: bf16[8,128], index: 9, kind: output, shape index: {}]
  %s10 = sld [smem:[#allocation0]]
  $region46: #{classifier_forward.1} parent=0
    _
  %s12 = ssub.s32 1, %s10
  %s13 = scalar_select 0, %s12, %s10
  // Predicated region
  $region2: #{classifier_forward.1} parent=0 // pred_check
    _
  $region3: #{classifier_forward.1} parent=0 // pred_check_branch
    %15 = sbr.rel (0) target = $region5
  $region4: #{classifier_forward.1} parent=0 // pred_region
    _
  $region5: #{classifier_forward.1} parent=0 // pred_fallthru
    _
  // Predicated region
  $region6: #{classifier_forward.1} parent=0 // pred_check
    _
  $region7: #{classifier_forward.1} parent=0 // pred_check_branch
    %17 = sbr.rel (0) target = $region9
  $region8: #{classifier_forward.1} parent=0 // pred_region
    _
  $region9: #{classifier_forward.1} parent=0 // pred_fallthru
    _
  // Predicated region
  $region10: #{classifier_forward.1} parent=0 // pred_check
    _
  $region11: #{classifier_forward.1} parent=0 // pred_check_branch
    %19 = sbr.rel (0) target = $region13
  $region12: #{classifier_forward.1} parent=0 // pred_region
    _
  $region13: #{classifier_forward.1} parent=0 // pred_fallthru
    _
  // Predicated region
  $region14: #{classifier_forward.1} parent=0 // pred_check
    _
  $region15: #{classifier_forward.1} parent=0 // pred_check_branch
    %21 = sbr.rel (0) target = $region17
  $region16: #{classifier_forward.1} parent=0 // pred_region
    _
  $region17: #{classifier_forward.1} parent=0 // pred_fallthru
    _
  // Predicated region
  $region18: #{classifier_forward.1} parent=0 // pred_check
    _
  $region19: #{classifier_forward.1} parent=0 // pred_check_branch
    %23 = sbr.rel (0) target = $region21
  $region20: #{classifier_forward.1} parent=0 // pred_region
    _
  $region21: #{classifier_forward.1} parent=0 // pred_fallthru
    _
  // Predicated region
  $region22: #{classifier_forward.1} parent=0 // pred_check
    _
  $region23: #{classifier_forward.1} parent=0 // pred_check_branch
    %25 = sbr.rel (0) target = $region25
  $region24: #{classifier_forward.1} parent=0 // pred_region
    _
  $region25: #{classifier_forward.1} parent=0 // pred_fallthru
    _
  // Predicated region
  $region26: #{classifier_forward.1} parent=0 // pred_check
    _
  $region27: #{classifier_forward.1} parent=0 // pred_check_branch
    %27 = sbr.rel (0) target = $region29
  $region28: #{classifier_forward.1} parent=0 // pred_region
    _
  $region29: #{classifier_forward.1} parent=0 // pred_fallthru
    _
  // Predicated region
  $region30: #{classifier_forward.1} parent=0 // pred_check
    _
  $region31: #{classifier_forward.1} parent=0 // pred_check_branch
    %29 = sbr.rel (0) target = $region33
  $region32: #{classifier_forward.1} parent=0 // pred_region
    _
  $region33: #{classifier_forward.1} parent=0 // pred_fallthru
    _
  // Predicated region
  $region34: #{classifier_forward.1} parent=0 // pred_check
    _
  $region35: #{classifier_forward.1} parent=0 // pred_check_branch
    %31 = sbr.rel (0) target = $region37
  $region36: #{classifier_forward.1} parent=0 // pred_region
    _
  $region37: #{classifier_forward.1} parent=0 // pred_fallthru
    _
  %v33 = vld [vmem:[%s0] sm:$0xff]
  %v34 = vld [vmem:[%s0 + $0x8] sm:$0xff]
  %v35 = vld [vmem:[%s0 + $0x10] sm:$0xff]
  %v36 = vld [vmem:[%s0 + $0x18] sm:$0xf]
  %v37 = vld [vmem:[%s1] sm:$0xff]
  %v38 = vld [vmem:[%s1 + $0x8] sm:$0xff]
  %v39 = vld [vmem:[%s1 + $0x10] sm:$0xff]
  %v40 = vld [vmem:[%s1 + $0x18] sm:$0xff]
  %v41 = vld [vmem:[%s1 + $0x20] sm:$0xff]
  %v42 = vld [vmem:[%s1 + $0x28] sm:$0xff]
  %v43 = vld [vmem:[%s1 + $0x30] sm:$0xff]
  %v44 = vld [vmem:[%s1 + $0x38] sm:$0xff]
  %v45 = vld [vmem:[%s1 + $0x40] sm:$0xff]
  %v46 = vld [vmem:[%s1 + $0x48] sm:$0xff]
  %v47 = vld [vmem:[%s1 + $0x50] sm:$0xff]
  %v48 = vld [vmem:[%s1 + $0x58] sm:$0xff]
  %v49 = vld [vmem:[%s1 + $0x60] sm:$0xff]
  %v50 = vld [vmem:[%s1 + $0x68] sm:$0xff]
  %v51 = vld [vmem:[%s1 + $0x70] sm:$0xff]
  %v52 = vld [vmem:[%s1 + $0x78] sm:$0xff]
  %v53 = vld [vmem:[%s1 + $0x80] sm:$0xff]
  %v54 = vld [vmem:[%s1 + $0x88] sm:$0xff]
  %v55 = vld [vmem:[%s1 + $0x90] sm:$0xff]
  %v56 = vld [vmem:[%s1 + $0x98] sm:$0xff]
  %v57 = vld [vmem:[%s1 + $0xa0] sm:$0xff]
  %v58 = vld [vmem:[%s1 + $0xa8] sm:$0xff]
  %v59 = vld [vmem:[%s1 + $0xb0] sm:$0xff]
  %v60 = vld [vmem:[%s1 + $0xb8] sm:$0xff]
  %v61 = vld [vmem:[%s1 + $0xc0] sm:$0xff]
  %v62 = vld [vmem:[%s1 + $0xc8] sm:$0xff]
  %v63 = vld [vmem:[%s1 + $0xd0] sm:$0xff]
  %v64 = vld [vmem:[%s1 + $0xd8] sm:$0xff]
  %v65 = vld [vmem:[%s1 + $0xe0] sm:$0xff]
  %v66 = vld [vmem:[%s1 + $0xe8] sm:$0xff]
  %v67 = vld [vmem:[%s1 + $0xf0] sm:$0xff]
  %v68 = vld [vmem:[%s1 + $0xf8] sm:$0xff]
  %v69 = vld [vmem:[%s1 + $0x100] sm:$0xff]
  %v70 = vld [vmem:[%s1 + $0x108] sm:$0xff]
  %v71 = vld [vmem:[%s1 + $0x110] sm:$0xff]
  %v72 = vld [vmem:[%s1 + $0x118] sm:$0xff]
  %v73 = vld [vmem:[%s1 + $0x120] sm:$0xff]
  %v74 = vld [vmem:[%s1 + $0x128] sm:$0xff]
  %v75 = vld [vmem:[%s1 + $0x130] sm:$0xff]
  %v76 = vld [vmem:[%s1 + $0x138] sm:$0xff]
  %v77 = vld [vmem:[%s1 + $0x140] sm:$0xff]
  %v78 = vld [vmem:[%s1 + $0x148] sm:$0xff]
  %v79 = vld [vmem:[%s1 + $0x150] sm:$0xff]
  %v80 = vld [vmem:[%s1 + $0x158] sm:$0xff]
  %v81 = vld [vmem:[%s1 + $0x160] sm:$0xff]
  %v82 = vld [vmem:[%s1 + $0x168] sm:$0xff]
  %v83 = vld [vmem:[%s1 + $0x170] sm:$0xff]
  %v84 = vld [vmem:[%s1 + $0x178] sm:$0xff]
  %v85 = vld [vmem:[%s1 + $0x180] sm:$0xff]
  %v86 = vld [vmem:[%s1 + $0x188] sm:$0xff]
  %v87 = vld [vmem:[%s1 + $0x190] sm:$0xff]
  %v88 = vld [vmem:[%s1 + $0x198] sm:$0xff]
  %v89 = vld [vmem:[%s1 + $0x1a0] sm:$0xff]
  %v90 = vld [vmem:[%s1 + $0x1a8] sm:$0xff]
  %v91 = vld [vmem:[%s1 + $0x1b0] sm:$0xff]
  %v92 = vld [vmem:[%s1 + $0x1b8] sm:$0xff]
  %v93 = vld [vmem:[%s1 + $0x1c0] sm:$0xff]
  %v94 = vld [vmem:[%s1 + $0x1c8] sm:$0xff]
  %v95 = vld [vmem:[%s1 + $0x1d0] sm:$0xff]
  %v96 = vld [vmem:[%s1 + $0x1d8] sm:$0xff]
  %v97 = vld [vmem:[%s1 + $0x1e0] sm:$0xff]
  %v98 = vld [vmem:[%s1 + $0x1e8] sm:$0xff]
  %v99 = vld [vmem:[%s1 + $0x1f0] sm:$0xff]
  %v100 = vld [vmem:[%s1 + $0x1f8] sm:$0xff]
  %v101 = vld [vmem:[%s1 + $0x200] sm:$0xff]
  %v102 = vld [vmem:[%s1 + $0x208] sm:$0xff]
  %v103 = vld [vmem:[%s1 + $0x210] sm:$0xff]
  %v104 = vld [vmem:[%s1 + $0x218] sm:$0xff]
  %v105 = vld [vmem:[%s1 + $0x220] sm:$0xff]
  %v106 = vld [vmem:[%s1 + $0x228] sm:$0xff]
  %v107 = vld [vmem:[%s1 + $0x230] sm:$0xff]
  %v108 = vld [vmem:[%s1 + $0x238] sm:$0xff]
  %v109 = vld [vmem:[%s1 + $0x240] sm:$0xff]
  %v110 = vld [vmem:[%s1 + $0x248] sm:$0xff]
  %v111 = vld [vmem:[%s1 + $0x250] sm:$0xff]
  %v112 = vld [vmem:[%s1 + $0x258] sm:$0xff]
  %v113 = vld [vmem:[%s1 + $0x260] sm:$0xff]
  %v114 = vld [vmem:[%s1 + $0x268] sm:$0xff]
  %v115 = vld [vmem:[%s1 + $0x270] sm:$0xff]
  %v116 = vld [vmem:[%s1 + $0x278] sm:$0xff]
  %v117 = vld [vmem:[%s1 + $0x280] sm:$0xff]
  %v118 = vld [vmem:[%s1 + $0x288] sm:$0xff]
  %v119 = vld [vmem:[%s1 + $0x290] sm:$0xff]
  %v120 = vld [vmem:[%s1 + $0x298] sm:$0xff]
  %v121 = vld [vmem:[%s1 + $0x2a0] sm:$0xff]
  %v122 = vld [vmem:[%s1 + $0x2a8] sm:$0xff]
  %v123 = vld [vmem:[%s1 + $0x2b0] sm:$0xff]
  %v124 = vld [vmem:[%s1 + $0x2b8] sm:$0xff]
  %v125 = vld [vmem:[%s1 + $0x2c0] sm:$0xff]
  %v126 = vld [vmem:[%s1 + $0x2c8] sm:$0xff]
  %v127 = vld [vmem:[%s1 + $0x2d0] sm:$0xff]
  %v128 = vld [vmem:[%s1 + $0x2d8] sm:$0xff]
  %v129 = vld [vmem:[%s1 + $0x2e0] sm:$0xff]
  %v130 = vld [vmem:[%s1 + $0x2e8] sm:$0xff]
  %v131 = vld [vmem:[%s1 + $0x2f0] sm:$0xff]
  %v132 = vld [vmem:[%s1 + $0x2f8] sm:$0xff]
  %v133 = vld [vmem:[%s1 + $0x300] sm:$0xff]
  %v134 = vld [vmem:[%s1 + $0x308] sm:$0xff]
  %v135 = vld [vmem:[%s2] sm:$0x3]
  %v137 = vlaneseq
  %v138 = vshrl.u32 %v137, 7
  %v139 = vsub.s32 0, %v138
  %v140 = vrot.slane %v135, %v139
  %v141 = vlaneseq
  %v142 = vshrl.u32 %v141, 7
  %v143 = vsub.s32 1, %v142
  %v144 = vrot.slane %v135, %v143
  %v151 = vunpack.c.l.b16 %v33
  %v152 = vunpack.c.h.b16 %v33
  %v153 = vunpack.c.l.b16 %v34
  %v154 = vunpack.c.h.b16 %v34
  %v155 = vunpack.c.l.b16 %v35
  %v156 = vunpack.c.h.b16 %v35
  %v157 = vunpack.c.l.b16 %v36
  %v158 = vpack.c.b16 %v151, %v151
  %v159 = vpack.c.b16 %v152, %v152
  %v160 = vpack.c.b16 %v153, %v153
  %v161 = vpack.c.b16 %v154, %v154
  %v162 = vpack.c.b16 %v155, %v155
  %v163 = vpack.c.b16 %v156, %v156
  %v164 = vpack.c.b16 %v157, %v157
  %v269 = vunpack.c.l.b16 %v37
  %v270 = vunpack.c.h.b16 %v37
  %v271 = vunpack.c.l.b16 %v38
  %v272 = vunpack.c.h.b16 %v38
  %v273 = vunpack.c.l.b16 %v39
  %v274 = vunpack.c.h.b16 %v39
  %v275 = vunpack.c.l.b16 %v40
  %v276 = vunpack.c.h.b16 %v40
  %v277 = vunpack.c.l.b16 %v41
  %v278 = vunpack.c.h.b16 %v41
  %v279 = vunpack.c.l.b16 %v42
  %v280 = vunpack.c.h.b16 %v42
  %v281 = vunpack.c.l.b16 %v43
  %v282 = vunpack.c.h.b16 %v43
  %v283 = vunpack.c.l.b16 %v44
  %v284 = vunpack.c.h.b16 %v44
  %v285 = vunpack.c.l.b16 %v45
  %v286 = vunpack.c.h.b16 %v45
  %v287 = vunpack.c.l.b16 %v46
  %v288 = vunpack.c.h.b16 %v46
  %v289 = vunpack.c.l.b16 %v47
  %v290 = vunpack.c.h.b16 %v47
  %v291 = vunpack.c.l.b16 %v48
  %v292 = vunpack.c.h.b16 %v48
  %v293 = vunpack.c.l.b16 %v49
  %v294 = vunpack.c.h.b16 %v49
  %v295 = vunpack.c.l.b16 %v50
  %v296 = vunpack.c.h.b16 %v50
  %v297 = vunpack.c.l.b16 %v51
  %v298 = vunpack.c.h.b16 %v51
  %v299 = vunpack.c.l.b16 %v52
  %v300 = vunpack.c.h.b16 %v52
  %v301 = vunpack.c.l.b16 %v53
  %v302 = vunpack.c.h.b16 %v53
  %v303 = vunpack.c.l.b16 %v54
  %v304 = vunpack.c.h.b16 %v54
  %v305 = vunpack.c.l.b16 %v55
  %v306 = vunpack.c.h.b16 %v55
  %v307 = vunpack.c.l.b16 %v56
  %v308 = vunpack.c.h.b16 %v56
  %v309 = vunpack.c.l.b16 %v57
  %v310 = vunpack.c.h.b16 %v57
  %v311 = vunpack.c.l.b16 %v58
  %v312 = vunpack.c.h.b16 %v58
  %v313 = vunpack.c.l.b16 %v59
  %v314 = vunpack.c.h.b16 %v59
  %v315 = vunpack.c.l.b16 %v60
  %v316 = vunpack.c.h.b16 %v60
  %v317 = vunpack.c.l.b16 %v61
  %v318 = vunpack.c.h.b16 %v61
  %v319 = vunpack.c.l.b16 %v62
  %v320 = vunpack.c.h.b16 %v62
  %v321 = vunpack.c.l.b16 %v63
  %v322 = vunpack.c.h.b16 %v63
  %v323 = vunpack.c.l.b16 %v64
  %v324 = vunpack.c.h.b16 %v64
  %v325 = vunpack.c.l.b16 %v65
  %v326 = vunpack.c.h.b16 %v65
  %v327 = vunpack.c.l.b16 %v66
  %v328 = vunpack.c.h.b16 %v66
  %v329 = vunpack.c.l.b16 %v67
  %v330 = vunpack.c.h.b16 %v67
  %v331 = vunpack.c.l.b16 %v68
  %v332 = vunpack.c.h.b16 %v68
  %v333 = vunpack.c.l.b16 %v69
  %v334 = vunpack.c.h.b16 %v69
  %v335 = vunpack.c.l.b16 %v70
  %v336 = vunpack.c.h.b16 %v70
  %v337 = vunpack.c.l.b16 %v71
  %v338 = vunpack.c.h.b16 %v71
  %v339 = vunpack.c.l.b16 %v72
  %v340 = vunpack.c.h.b16 %v72
  %v341 = vunpack.c.l.b16 %v73
  %v342 = vunpack.c.h.b16 %v73
  %v343 = vunpack.c.l.b16 %v74
  %v344 = vunpack.c.h.b16 %v74
  %v345 = vunpack.c.l.b16 %v75
  %v346 = vunpack.c.h.b16 %v75
  %v347 = vunpack.c.l.b16 %v76
  %v348 = vunpack.c.h.b16 %v76
  %v349 = vunpack.c.l.b16 %v77
  %v350 = vunpack.c.h.b16 %v77
  %v351 = vunpack.c.l.b16 %v78
  %v352 = vunpack.c.h.b16 %v78
  %v353 = vunpack.c.l.b16 %v79
  %v354 = vunpack.c.h.b16 %v79
  %v355 = vunpack.c.l.b16 %v80
  %v356 = vunpack.c.h.b16 %v80
  %v357 = vunpack.c.l.b16 %v81
  %v358 = vunpack.c.h.b16 %v81
  %v359 = vunpack.c.l.b16 %v82
  %v360 = vunpack.c.h.b16 %v82
  %v361 = vunpack.c.l.b16 %v83
  %v362 = vunpack.c.h.b16 %v83
  %v363 = vunpack.c.l.b16 %v84
  %v364 = vunpack.c.h.b16 %v84
  %v365 = vunpack.c.l.b16 %v85
  %v366 = vunpack.c.h.b16 %v85
  %v367 = vunpack.c.l.b16 %v86
  %v368 = vunpack.c.h.b16 %v86
  %v369 = vunpack.c.l.b16 %v87
  %v370 = vunpack.c.h.b16 %v87
  %v371 = vunpack.c.l.b16 %v88
  %v372 = vunpack.c.h.b16 %v88
  %v373 = vunpack.c.l.b16 %v89
  %v374 = vunpack.c.h.b16 %v89
  %v375 = vunpack.c.l.b16 %v90
  %v376 = vunpack.c.h.b16 %v90
  %v377 = vunpack.c.l.b16 %v91
  %v378 = vunpack.c.h.b16 %v91
  %v379 = vunpack.c.l.b16 %v92
  %v380 = vunpack.c.h.b16 %v92
  %v381 = vunpack.c.l.b16 %v93
  %v382 = vunpack.c.h.b16 %v93
  %v383 = vunpack.c.l.b16 %v94
  %v384 = vunpack.c.h.b16 %v94
  %v385 = vunpack.c.l.b16 %v95
  %v386 = vunpack.c.h.b16 %v95
  %v387 = vunpack.c.l.b16 %v96
  %v388 = vunpack.c.h.b16 %v96
  %v389 = vunpack.c.l.b16 %v97
  %v390 = vunpack.c.h.b16 %v97
  %v391 = vunpack.c.l.b16 %v98
  %v392 = vunpack.c.h.b16 %v98
  %v393 = vunpack.c.l.b16 %v99
  %v394 = vunpack.c.h.b16 %v99
  %v395 = vunpack.c.l.b16 %v100
  %v396 = vunpack.c.h.b16 %v100
  %v397 = vunpack.c.l.b16 %v101
  %v398 = vunpack.c.h.b16 %v101
  %v399 = vunpack.c.l.b16 %v102
  %v400 = vunpack.c.h.b16 %v102
  %v401 = vunpack.c.l.b16 %v103
  %v402 = vunpack.c.h.b16 %v103
  %v403 = vunpack.c.l.b16 %v104
  %v404 = vunpack.c.h.b16 %v104
  %v405 = vunpack.c.l.b16 %v105
  %v406 = vunpack.c.h.b16 %v105
  %v407 = vunpack.c.l.b16 %v106
  %v408 = vunpack.c.h.b16 %v106
  %v409 = vunpack.c.l.b16 %v107
  %v410 = vunpack.c.h.b16 %v107
  %v411 = vunpack.c.l.b16 %v108
  %v412 = vunpack.c.h.b16 %v108
  %v413 = vunpack.c.l.b16 %v109
  %v414 = vunpack.c.h.b16 %v109
  %v415 = vunpack.c.l.b16 %v110
  %v416 = vunpack.c.h.b16 %v110
  %v417 = vunpack.c.l.b16 %v111
  %v418 = vunpack.c.h.b16 %v111
  %v419 = vunpack.c.l.b16 %v112
  %v420 = vunpack.c.h.b16 %v112
  %v421 = vunpack.c.l.b16 %v113
  %v422 = vunpack.c.h.b16 %v113
  %v423 = vunpack.c.l.b16 %v114
  %v424 = vunpack.c.h.b16 %v114
  %v425 = vunpack.c.l.b16 %v115
  %v426 = vunpack.c.h.b16 %v115
  %v427 = vunpack.c.l.b16 %v116
  %v428 = vunpack.c.h.b16 %v116
  %v429 = vunpack.c.l.b16 %v117
  %v430 = vunpack.c.h.b16 %v117
  %v431 = vunpack.c.l.b16 %v118
  %v432 = vunpack.c.h.b16 %v118
  %v433 = vunpack.c.l.b16 %v119
  %v434 = vunpack.c.h.b16 %v119
  %v435 = vunpack.c.l.b16 %v120
  %v436 = vunpack.c.h.b16 %v120
  %v437 = vunpack.c.l.b16 %v121
  %v438 = vunpack.c.h.b16 %v121
  %v439 = vunpack.c.l.b16 %v122
  %v440 = vunpack.c.h.b16 %v122
  %v441 = vunpack.c.l.b16 %v123
  %v442 = vunpack.c.h.b16 %v123
  %v443 = vunpack.c.l.b16 %v124
  %v444 = vunpack.c.h.b16 %v124
  %v445 = vunpack.c.l.b16 %v125
  %v446 = vunpack.c.h.b16 %v125
  %v447 = vunpack.c.l.b16 %v126
  %v448 = vunpack.c.h.b16 %v126
  %v449 = vunpack.c.l.b16 %v127
  %v450 = vunpack.c.h.b16 %v127
  %v451 = vunpack.c.l.b16 %v128
  %v452 = vunpack.c.h.b16 %v128
  %v453 = vunpack.c.l.b16 %v129
  %v454 = vunpack.c.h.b16 %v129
  %v455 = vunpack.c.l.b16 %v130
  %v456 = vunpack.c.h.b16 %v130
  %v457 = vunpack.c.l.b16 %v131
  %v458 = vunpack.c.h.b16 %v131
  %v459 = vunpack.c.l.b16 %v132
  %v460 = vunpack.c.h.b16 %v132
  %v461 = vunpack.c.l.b16 %v133
  %v462 = vunpack.c.h.b16 %v133
  %v463 = vunpack.c.l.b16 %v134
  %v464 = vunpack.c.h.b16 %v134
  %v465 = vpack.c.b16 %v271, %v269
  %v466 = vpack.c.b16 %v272, %v270
  %v467 = vpack.c.b16 %v275, %v273
  %v468 = vpack.c.b16 %v276, %v274
  %v469 = vpack.c.b16 %v279, %v277
  %v470 = vpack.c.b16 %v280, %v278
  %v471 = vpack.c.b16 %v283, %v281
  %v472 = vpack.c.b16 %v284, %v282
  %v473 = vpack.c.b16 %v287, %v285
  %v474 = vpack.c.b16 %v288, %v286
  %v475 = vpack.c.b16 %v291, %v289
  %v476 = vpack.c.b16 %v292, %v290
  %v477 = vpack.c.b16 %v295, %v293
  %v478 = vpack.c.b16 %v296, %v294
  %v479 = vpack.c.b16 %v299, %v297
  %v480 = vpack.c.b16 %v300, %v298
  %v481 = vpack.c.b16 %v303, %v301
  %v482 = vpack.c.b16 %v304, %v302
  %v483 = vpack.c.b16 %v307, %v305
  %v484 = vpack.c.b16 %v308, %v306
  %v485 = vpack.c.b16 %v311, %v309
  %v486 = vpack.c.b16 %v312, %v310
  %v487 = vpack.c.b16 %v315, %v313
  %v488 = vpack.c.b16 %v316, %v314
  %v489 = vpack.c.b16 %v319, %v317
  %v490 = vpack.c.b16 %v320, %v318
  %v491 = vpack.c.b16 %v323, %v321
  %v492 = vpack.c.b16 %v324, %v322
  %v493 = vpack.c.b16 %v327, %v325
  %v494 = vpack.c.b16 %v328, %v326
  %v495 = vpack.c.b16 %v331, %v329
  %v496 = vpack.c.b16 %v332, %v330
  %v497 = vpack.c.b16 %v335, %v333
  %v498 = vpack.c.b16 %v336, %v334
  %v499 = vpack.c.b16 %v339, %v337
  %v500 = vpack.c.b16 %v340, %v338
  %v501 = vpack.c.b16 %v343, %v341
  %v502 = vpack.c.b16 %v344, %v342
  %v503 = vpack.c.b16 %v347, %v345
  %v504 = vpack.c.b16 %v348, %v346
  %v505 = vpack.c.b16 %v351, %v349
  %v506 = vpack.c.b16 %v352, %v350
  %v507 = vpack.c.b16 %v355, %v353
  %v508 = vpack.c.b16 %v356, %v354
  %v509 = vpack.c.b16 %v359, %v357
  %v510 = vpack.c.b16 %v360, %v358
  %v511 = vpack.c.b16 %v363, %v361
  %v512 = vpack.c.b16 %v364, %v362
  %v513 = vpack.c.b16 %v367, %v365
  %v514 = vpack.c.b16 %v368, %v366
  %v515 = vpack.c.b16 %v371, %v369
  %v516 = vpack.c.b16 %v372, %v370
  %v517 = vpack.c.b16 %v375, %v373
  %v518 = vpack.c.b16 %v376, %v374
  %v519 = vpack.c.b16 %v379, %v377
  %v520 = vpack.c.b16 %v380, %v378
  %v521 = vpack.c.b16 %v383, %v381
  %v522 = vpack.c.b16 %v384, %v382
  %v523 = vpack.c.b16 %v387, %v385
  %v524 = vpack.c.b16 %v388, %v386
  %v525 = vpack.c.b16 %v391, %v389
  %v526 = vpack.c.b16 %v392, %v390
  %v527 = vpack.c.b16 %v395, %v393
  %v528 = vpack.c.b16 %v396, %v394
  %v529 = vpack.c.b16 %v399, %v397
  %v530 = vpack.c.b16 %v400, %v398
  %v531 = vpack.c.b16 %v403, %v401
  %v532 = vpack.c.b16 %v404, %v402
  %v533 = vpack.c.b16 %v407, %v405
  %v534 = vpack.c.b16 %v408, %v406
  %v535 = vpack.c.b16 %v411, %v409
  %v536 = vpack.c.b16 %v412, %v410
  %v537 = vpack.c.b16 %v415, %v413
  %v538 = vpack.c.b16 %v416, %v414
  %v539 = vpack.c.b16 %v419, %v417
  %v540 = vpack.c.b16 %v420, %v418
  %v541 = vpack.c.b16 %v423, %v421
  %v542 = vpack.c.b16 %v424, %v422
  %v543 = vpack.c.b16 %v427, %v425
  %v544 = vpack.c.b16 %v428, %v426
  %v545 = vpack.c.b16 %v431, %v429
  %v546 = vpack.c.b16 %v432, %v430
  %v547 = vpack.c.b16 %v435, %v433
  %v548 = vpack.c.b16 %v436, %v434
  %v549 = vpack.c.b16 %v439, %v437
  %v550 = vpack.c.b16 %v440, %v438
  %v551 = vpack.c.b16 %v443, %v441
  %v552 = vpack.c.b16 %v444, %v442
  %v553 = vpack.c.b16 %v447, %v445
  %v554 = vpack.c.b16 %v448, %v446
  %v555 = vpack.c.b16 %v451, %v449
  %v556 = vpack.c.b16 %v452, %v450
  %v557 = vpack.c.b16 %v455, %v453
  %v558 = vpack.c.b16 %v456, %v454
  %v559 = vpack.c.b16 %v459, %v457
  %v560 = vpack.c.b16 %v460, %v458
  %v561 = vpack.c.b16 %v463, %v461
  %v562 = vpack.c.b16 %v464, %v462
  %vm661 = vcmask 130048
  %v663 = vsel %vm661, %v164, 0
  %665 = vmatprep.subr.bf16.mxu0 %v480
  %666 = vmatpush1.bf16.msra.mxu0 %v479
  %667 = vmatprep.subr.bf16.mxu0 %v478
  %668 = vmatpush1.bf16.msra.mxu0 %v477
  %669 = vmatprep.subr.bf16.mxu0 %v476
  %670 = vmatpush1.bf16.msra.mxu0 %v475
  %671 = vmatprep.subr.bf16.mxu0 %v474
  %672 = vmatpush1.bf16.msra.mxu0 %v473
  %673 = vmatprep.subr.bf16.mxu0 %v472
  %674 = vmatpush1.bf16.msra.mxu0 %v471
  %675 = vmatprep.subr.bf16.mxu0 %v470
  %676 = vmatpush1.bf16.msra.mxu0 %v469
  %677 = vmatprep.subr.bf16.mxu0 %v468
  %678 = vmatpush1.bf16.msra.mxu0 %v467
  %679 = vmatprep.subr.bf16.mxu0 %v466
  %680 = vmatpush1.bf16.msra.mxu0 %v465
  %681 = vmatprep.subr.bf16.mxu0 %v496
  %682 = vmatpush2.bf16.msra.mxu0 %v495
  %683 = vmatprep.subr.bf16.mxu0 %v494
  %684 = vmatpush2.bf16.msra.mxu0 %v493
  %685 = vmatprep.subr.bf16.mxu0 %v492
  %686 = vmatpush2.bf16.msra.mxu0 %v491
  %687 = vmatprep.subr.bf16.mxu0 %v490
  %688 = vmatpush2.bf16.msra.mxu0 %v489
  %689 = vmatprep.subr.bf16.mxu0 %v488
  %690 = vmatpush2.bf16.msra.mxu0 %v487
  %691 = vmatprep.subr.bf16.mxu0 %v486
  %692 = vmatpush2.bf16.msra.mxu0 %v485
  %693 = vmatprep.subr.bf16.mxu0 %v484
  %694 = vmatpush2.bf16.msra.mxu0 %v483
  %695 = vmatprep.subr.bf16.mxu0 %v482
  %696 = vmatpush2.bf16.msra.mxu0 %v481
  %697 = vmatprep.mubr.bf16.mxu0 %v159
  %698 = vmatmul.mubr.bf16.gmra.mxu0 %v158
  %v699 = vpop.f32.mrf.mxu0
  %v700 = vadd.f32 %v140, %v699
  %v701 = vpop.f32.mrf.mxu0
  %v702 = vadd.f32 %v144, %v701
  %v703 = vpop.f32.mrf.mxu0
  %v704 = vpop.f32.mrf.mxu0
  %705 = vdwg.mxu0
  %706 = vmatprep.subr.bf16.mxu0 %v512
  %707 = vmatpush1.bf16.msra.mxu0 %v511
  %708 = vmatprep.subr.bf16.mxu0 %v510
  %709 = vmatpush1.bf16.msra.mxu0 %v509
  %710 = vmatprep.subr.bf16.mxu0 %v508
  %711 = vmatpush1.bf16.msra.mxu0 %v507
  %712 = vmatprep.subr.bf16.mxu0 %v506
  %713 = vmatpush1.bf16.msra.mxu0 %v505
  %714 = vmatprep.subr.bf16.mxu0 %v504
  %715 = vmatpush1.bf16.msra.mxu0 %v503
  %716 = vmatprep.subr.bf16.mxu0 %v502
  %717 = vmatpush1.bf16.msra.mxu0 %v501
  %718 = vmatprep.subr.bf16.mxu0 %v500
  %719 = vmatpush1.bf16.msra.mxu0 %v499
  %720 = vmatprep.subr.bf16.mxu0 %v498
  %721 = vmatpush1.bf16.msra.mxu0 %v497
  %722 = vmatprep.subr.bf16.mxu0 %v528
  %723 = vmatpush2.bf16.msra.mxu0 %v527
  %724 = vmatprep.subr.bf16.mxu0 %v526
  %725 = vmatpush2.bf16.msra.mxu0 %v525
  %726 = vmatprep.subr.bf16.mxu0 %v524
  %727 = vmatpush2.bf16.msra.mxu0 %v523
  %728 = vmatprep.subr.bf16.mxu0 %v522
  %729 = vmatpush2.bf16.msra.mxu0 %v521
  %730 = vmatprep.subr.bf16.mxu0 %v520
  %731 = vmatpush2.bf16.msra.mxu0 %v519
  %732 = vmatprep.subr.bf16.mxu0 %v518
  %733 = vmatpush2.bf16.msra.mxu0 %v517
  %734 = vmatprep.subr.bf16.mxu0 %v516
  %735 = vmatpush2.bf16.msra.mxu0 %v515
  %736 = vmatprep.subr.bf16.mxu0 %v514
  %737 = vmatpush2.bf16.msra.mxu0 %v513
  %738 = vmatprep.mubr.bf16.mxu0 %v161
  %739 = vmatmul.mubr.bf16.gmra.mxu0 %v160
  %v740 = vpop.f32.mrf.mxu0
  %v741 = vadd.f32 %v700, %v740
  %v742 = vpop.f32.mrf.mxu0
  %v743 = vadd.f32 %v702, %v742
  %v744 = vpop.f32.mrf.mxu0
  %v745 = vpop.f32.mrf.mxu0
  %746 = vdwg.mxu0
  %747 = vmatprep.subr.bf16.mxu0 %v544
  %748 = vmatpush1.bf16.msra.mxu0 %v543
  %749 = vmatprep.subr.bf16.mxu0 %v542
  %750 = vmatpush1.bf16.msra.mxu0 %v541
  %751 = vmatprep.subr.bf16.mxu0 %v540
  %752 = vmatpush1.bf16.msra.mxu0 %v539
  %753 = vmatprep.subr.bf16.mxu0 %v538
  %754 = vmatpush1.bf16.msra.mxu0 %v537
  %755 = vmatprep.subr.bf16.mxu0 %v536
  %756 = vmatpush1.bf16.msra.mxu0 %v535
  %757 = vmatprep.subr.bf16.mxu0 %v534
  %758 = vmatpush1.bf16.msra.mxu0 %v533
  %759 = vmatprep.subr.bf16.mxu0 %v532
  %760 = vmatpush1.bf16.msra.mxu0 %v531
  %761 = vmatprep.subr.bf16.mxu0 %v530
  %762 = vmatpush1.bf16.msra.mxu0 %v529
  %763 = vmatprep.subr.bf16.mxu0 %v560
  %764 = vmatpush2.bf16.msra.mxu0 %v559
  %765 = vmatprep.subr.bf16.mxu0 %v558
  %766 = vmatpush2.bf16.msra.mxu0 %v557
  %767 = vmatprep.subr.bf16.mxu0 %v556
  %768 = vmatpush2.bf16.msra.mxu0 %v555
  %769 = vmatprep.subr.bf16.mxu0 %v554
  %770 = vmatpush2.bf16.msra.mxu0 %v553
  %771 = vmatprep.subr.bf16.mxu0 %v552
  %772 = vmatpush2.bf16.msra.mxu0 %v551
  %773 = vmatprep.subr.bf16.mxu0 %v550
  %774 = vmatpush2.bf16.msra.mxu0 %v549
  %775 = vmatprep.subr.bf16.mxu0 %v548
  %776 = vmatpush2.bf16.msra.mxu0 %v547
  %777 = vmatprep.subr.bf16.mxu0 %v546
  %778 = vmatpush2.bf16.msra.mxu0 %v545
  %779 = vmatprep.mubr.bf16.mxu0 %v163
  %780 = vmatmul.mubr.bf16.gmra.mxu0 %v162
  %v781 = vpop.f32.mrf.mxu0
  %v782 = vadd.f32 %v741, %v781
  %v783 = vpop.f32.mrf.mxu0
  %v784 = vadd.f32 %v743, %v783
  %v785 = vpop.f32.mrf.mxu0
  %v786 = vpop.f32.mrf.mxu0
  %787 = vdwg.mxu0
  %788 = vmatprep.subr.bf16.mxu0 0
  %789 = vmatpush1.bf16.msra.mxu0 0
  %790 = vmatprep.subr.bf16.mxu0 0
  %791 = vmatpush1.bf16.msra.mxu0 0
  %792 = vmatprep.subr.bf16.mxu0 0
  %793 = vmatpush1.bf16.msra.mxu0 0
  %794 = vmatprep.subr.bf16.mxu0 0
  %795 = vmatpush1.bf16.msra.mxu0 0
  %796 = vmatprep.subr.bf16.mxu0 0
  %797 = vmatpush1.bf16.msra.mxu0 0
  %798 = vmatprep.subr.bf16.mxu0 0
  %799 = vmatpush1.bf16.msra.mxu0 0
  %800 = vmatprep.subr.bf16.mxu0 0
  %801 = vmatpush1.bf16.msra.mxu0 0
  %802 = vmatprep.subr.bf16.mxu0 %v562
  %803 = vmatpush1.bf16.msra.mxu0 %v561
  %804 = vmatprep.subr.bf16.mxu0 0
  %805 = vmatpush2.bf16.msra.mxu0 0
  %806 = vmatprep.subr.bf16.mxu0 0
  %807 = vmatpush2.bf16.msra.mxu0 0
  %808 = vmatprep.subr.bf16.mxu0 0
  %809 = vmatpush2.bf16.msra.mxu0 0
  %810 = vmatprep.subr.bf16.mxu0 0
  %811 = vmatpush2.bf16.msra.mxu0 0
  %812 = vmatprep.subr.bf16.mxu0 0
  %813 = vmatpush2.bf16.msra.mxu0 0
  %814 = vmatprep.subr.bf16.mxu0 0
  %815 = vmatpush2.bf16.msra.mxu0 0
  %816 = vmatprep.subr.bf16.mxu0 0
  %817 = vmatpush2.bf16.msra.mxu0 0
  %818 = vmatprep.subr.bf16.mxu0 0
  %819 = vmatpush2.bf16.msra.mxu0 0
  %820 = vmatprep.mubr.bf16.mxu0 0
  %821 = vmatmul.mubr.bf16.gmra.mxu0 %v663
  %v822 = vpop.f32.mrf.mxu0
  %v823 = vadd.f32 %v782, %v822
  %v824 = vpop.f32.mrf.mxu0
  %v825 = vadd.f32 %v784, %v824
  %v826 = vpop.f32.mrf.mxu0
  %v827 = vpop.f32.mrf.mxu0
  %828 = vdwg.mxu0
  %v829 = vmax.f32 %v823, 0.0
  %v830 = vmax.f32 %v825, 0.0
  %v831 = vpack.c.bf16 %v829, %v829
  %v832 = vpack.c.bf16 %v830, %v830
  %v833 = vld [vmem:[%s3] sm:$0xf]
  %v834 = vld [vmem:[%s3 + $0x4] sm:$0xf]
  %v835 = vld [vmem:[%s3 + $0x8] sm:$0xf]
  %v836 = vld [vmem:[%s3 + $0xc] sm:$0xf]
  %v837 = vld [vmem:[%s3 + $0x10] sm:$0xf]
  %v838 = vld [vmem:[%s3 + $0x14] sm:$0xf]
  %v839 = vld [vmem:[%s3 + $0x18] sm:$0xf]
  %v840 = vld [vmem:[%s3 + $0x1c] sm:$0xf]
  %v841 = vld [vmem:[%s3 + $0x20] sm:$0xf]
  %v842 = vld [vmem:[%s3 + $0x24] sm:$0xf]
  %v843 = vld [vmem:[%s3 + $0x28] sm:$0xf]
  %v844 = vld [vmem:[%s3 + $0x2c] sm:$0xf]
  %v845 = vld [vmem:[%s3 + $0x30] sm:$0xf]
  %v846 = vld [vmem:[%s3 + $0x34] sm:$0xf]
  %v847 = vld [vmem:[%s3 + $0x38] sm:$0xf]
  %v848 = vld [vmem:[%s3 + $0x3c] sm:$0xf]
  %v849 = vld [vmem:[%s3 + $0x40] sm:$0xf]
  %v850 = vld [vmem:[%s3 + $0x44] sm:$0xf]
  %v851 = vld [vmem:[%s3 + $0x48] sm:$0xf]
  %v852 = vld [vmem:[%s3 + $0x4c] sm:$0xf]
  %v853 = vld [vmem:[%s3 + $0x50] sm:$0xf]
  %v854 = vld [vmem:[%s3 + $0x54] sm:$0xf]
  %v855 = vld [vmem:[%s3 + $0x58] sm:$0xf]
  %v856 = vld [vmem:[%s3 + $0x5c] sm:$0xf]
  %v857 = vld [vmem:[%s3 + $0x60] sm:$0xf]
  %v858 = vld [vmem:[%s3 + $0x64] sm:$0xf]
  %v859 = vld [vmem:[%s3 + $0x68] sm:$0xf]
  %v860 = vld [vmem:[%s3 + $0x6c] sm:$0xf]
  %v861 = vld [vmem:[%s3 + $0x70] sm:$0xf]
  %v862 = vld [vmem:[%s3 + $0x74] sm:$0xf]
  %v863 = vld [vmem:[%s3 + $0x78] sm:$0xf]
  %v864 = vld [vmem:[%s3 + $0x7c] sm:$0xf]
  %v865 = vld [vmem:[%s4] sm:$0x1]
  %v867 = vlaneseq
  %v868 = vshrl.u32 %v867, 7
  %v869 = vsub.s32 0, %v868
  %v870 = vrot.slane %v865, %v869
  %v904 = vunpack.c.l.b16 %v833
  %v905 = vunpack.c.l.b16 %v834
  %v906 = vunpack.c.l.b16 %v835
  %v907 = vunpack.c.l.b16 %v836
  %v908 = vunpack.c.l.b16 %v837
  %v909 = vunpack.c.l.b16 %v838
  %v910 = vunpack.c.l.b16 %v839
  %v911 = vunpack.c.l.b16 %v840
  %v912 = vunpack.c.l.b16 %v841
  %v913 = vunpack.c.l.b16 %v842
  %v914 = vunpack.c.l.b16 %v843
  %v915 = vunpack.c.l.b16 %v844
  %v916 = vunpack.c.l.b16 %v845
  %v917 = vunpack.c.l.b16 %v846
  %v918 = vunpack.c.l.b16 %v847
  %v919 = vunpack.c.l.b16 %v848
  %v920 = vunpack.c.l.b16 %v849
  %v921 = vunpack.c.l.b16 %v850
  %v922 = vunpack.c.l.b16 %v851
  %v923 = vunpack.c.l.b16 %v852
  %v924 = vunpack.c.l.b16 %v853
  %v925 = vunpack.c.l.b16 %v854
  %v926 = vunpack.c.l.b16 %v855
  %v927 = vunpack.c.l.b16 %v856
  %v928 = vunpack.c.l.b16 %v857
  %v929 = vunpack.c.l.b16 %v858
  %v930 = vunpack.c.l.b16 %v859
  %v931 = vunpack.c.l.b16 %v860
  %v932 = vunpack.c.l.b16 %v861
  %v933 = vunpack.c.l.b16 %v862
  %v934 = vunpack.c.l.b16 %v863
  %v935 = vunpack.c.l.b16 %v864
  %v936 = vpack.c.b16 %v905, %v904
  %v937 = vpack.c.b16 %v907, %v906
  %v938 = vpack.c.b16 %v909, %v908
  %v939 = vpack.c.b16 %v911, %v910
  %v940 = vpack.c.b16 %v913, %v912
  %v941 = vpack.c.b16 %v915, %v914
  %v942 = vpack.c.b16 %v917, %v916
  %v943 = vpack.c.b16 %v919, %v918
  %v944 = vpack.c.b16 %v921, %v920
  %v945 = vpack.c.b16 %v923, %v922
  %v946 = vpack.c.b16 %v925, %v924
  %v947 = vpack.c.b16 %v927, %v926
  %v948 = vpack.c.b16 %v929, %v928
  %v949 = vpack.c.b16 %v931, %v930
  %v950 = vpack.c.b16 %v933, %v932
  %v951 = vpack.c.b16 %v935, %v934
  %968 = vmatprep.subr.bf16.mxu0 0
  %969 = vmatpush1.bf16.msra.mxu0 %v943
  %970 = vmatprep.subr.bf16.mxu0 0
  %971 = vmatpush1.bf16.msra.mxu0 %v942
  %972 = vmatprep.subr.bf16.mxu0 0
  %973 = vmatpush1.bf16.msra.mxu0 %v941
  %974 = vmatprep.subr.bf16.mxu0 0
  %975 = vmatpush1.bf16.msra.mxu0 %v940
  %976 = vmatprep.subr.bf16.mxu0 0
  %977 = vmatpush1.bf16.msra.mxu0 %v939
  %978 = vmatprep.subr.bf16.mxu0 0
  %979 = vmatpush1.bf16.msra.mxu0 %v938
  %980 = vmatprep.subr.bf16.mxu0 0
  %981 = vmatpush1.bf16.msra.mxu0 %v937
  %982 = vmatprep.subr.bf16.mxu0 0
  %983 = vmatpush1.bf16.msra.mxu0 %v936
  %984 = vmatprep.subr.bf16.mxu0 0
  %985 = vmatpush2.bf16.msra.mxu0 %v951
  %986 = vmatprep.subr.bf16.mxu0 0
  %987 = vmatpush2.bf16.msra.mxu0 %v950
  %988 = vmatprep.subr.bf16.mxu0 0
  %989 = vmatpush2.bf16.msra.mxu0 %v949
  %990 = vmatprep.subr.bf16.mxu0 0
  %991 = vmatpush2.bf16.msra.mxu0 %v948
  %992 = vmatprep.subr.bf16.mxu0 0
  %993 = vmatpush2.bf16.msra.mxu0 %v947
  %994 = vmatprep.subr.bf16.mxu0 0
  %995 = vmatpush2.bf16.msra.mxu0 %v946
  %996 = vmatprep.subr.bf16.mxu0 0
  %997 = vmatpush2.bf16.msra.mxu0 %v945
  %998 = vmatprep.subr.bf16.mxu0 0
  %999 = vmatpush2.bf16.msra.mxu0 %v944
  %1000 = vmatprep.mubr.bf16.mxu0 %v832
  %1001 = vmatmul.mubr.bf16.gmra.mxu0 %v831
  %v1002 = vpop.f32.mrf.mxu0
  %v1003 = vadd.f32 %v870, %v1002
  %v1004 = vpop.f32.mrf.mxu0
  %v1005 = vpop.f32.mrf.mxu0
  %v1006 = vpop.f32.mrf.mxu0
  %1007 = vdwg.mxu0
  %v1008 = vmax.f32 %v1003, 0.0
  %v1009 = vpack.c.bf16 %v1008, %v1008
  %v1010 = vld [vmem:[%s5] sm:$0xf]
  %v1011 = vld [vmem:[%s5 + $0x4] sm:$0xf]
  %v1012 = vld [vmem:[%s5 + $0x8] sm:$0xf]
  %v1013 = vld [vmem:[%s5 + $0xc] sm:$0xf]
  %v1014 = vld [vmem:[%s5 + $0x10] sm:$0xf]
  %v1015 = vld [vmem:[%s5 + $0x14] sm:$0xf]
  %v1016 = vld [vmem:[%s5 + $0x18] sm:$0xf]
  %v1017 = vld [vmem:[%s5 + $0x1c] sm:$0xf]
  %v1018 = vld [vmem:[%s5 + $0x20] sm:$0xf]
  %v1019 = vld [vmem:[%s5 + $0x24] sm:$0xf]
  %v1020 = vld [vmem:[%s5 + $0x28] sm:$0xf]
  %v1021 = vld [vmem:[%s5 + $0x2c] sm:$0xf]
  %v1022 = vld [vmem:[%s5 + $0x30] sm:$0xf]
  %v1023 = vld [vmem:[%s5 + $0x34] sm:$0xf]
  %v1024 = vld [vmem:[%s5 + $0x38] sm:$0xf]
  %v1025 = vld [vmem:[%s5 + $0x3c] sm:$0xf]
  %v1026 = vld [vmem:[%s6] sm:$0x1]
  %v1028 = vlaneseq
  %v1029 = vshrl.u32 %v1028, 7
  %v1030 = vsub.s32 0, %v1029
  %v1031 = vrot.slane %v1026, %v1030
  %v1049 = vunpack.c.l.b16 %v1010
  %v1050 = vunpack.c.l.b16 %v1011
  %v1051 = vunpack.c.l.b16 %v1012
  %v1052 = vunpack.c.l.b16 %v1013
  %v1053 = vunpack.c.l.b16 %v1014
  %v1054 = vunpack.c.l.b16 %v1015
  %v1055 = vunpack.c.l.b16 %v1016
  %v1056 = vunpack.c.l.b16 %v1017
  %v1057 = vunpack.c.l.b16 %v1018
  %v1058 = vunpack.c.l.b16 %v1019
  %v1059 = vunpack.c.l.b16 %v1020
  %v1060 = vunpack.c.l.b16 %v1021
  %v1061 = vunpack.c.l.b16 %v1022
  %v1062 = vunpack.c.l.b16 %v1023
  %v1063 = vunpack.c.l.b16 %v1024
  %v1064 = vunpack.c.l.b16 %v1025
  %v1065 = vpack.c.b16 %v1050, %v1049
  %v1066 = vpack.c.b16 %v1052, %v1051
  %v1067 = vpack.c.b16 %v1054, %v1053
  %v1068 = vpack.c.b16 %v1056, %v1055
  %v1069 = vpack.c.b16 %v1058, %v1057
  %v1070 = vpack.c.b16 %v1060, %v1059
  %v1071 = vpack.c.b16 %v1062, %v1061
  %v1072 = vpack.c.b16 %v1064, %v1063
  %1081 = vmatprep.subr.bf16.mxu0 0
  %1082 = vmatpush1.bf16.msra.mxu0 %v1072
  %1083 = vmatprep.subr.bf16.mxu0 0
  %1084 = vmatpush1.bf16.msra.mxu0 %v1071
  %1085 = vmatprep.subr.bf16.mxu0 0
  %1086 = vmatpush1.bf16.msra.mxu0 %v1070
  %1087 = vmatprep.subr.bf16.mxu0 0
  %1088 = vmatpush1.bf16.msra.mxu0 %v1069
  %1089 = vmatprep.subr.bf16.mxu0 0
  %1090 = vmatpush1.bf16.msra.mxu0 %v1068
  %1091 = vmatprep.subr.bf16.mxu0 0
  %1092 = vmatpush1.bf16.msra.mxu0 %v1067
  %1093 = vmatprep.subr.bf16.mxu0 0
  %1094 = vmatpush1.bf16.msra.mxu0 %v1066
  %1095 = vmatprep.subr.bf16.mxu0 0
  %1096 = vmatpush1.bf16.msra.mxu0 %v1065
  %1097 = vmatprep.subr.bf16.mxu0 0
  %1098 = vmatpush2.bf16.msra.mxu0 0
  %1099 = vmatprep.subr.bf16.mxu0 0
  %1100 = vmatpush2.bf16.msra.mxu0 0
  %1101 = vmatprep.subr.bf16.mxu0 0
  %1102 = vmatpush2.bf16.msra.mxu0 0
  %1103 = vmatprep.subr.bf16.mxu0 0
  %1104 = vmatpush2.bf16.msra.mxu0 0
  %1105 = vmatprep.subr.bf16.mxu0 0
  %1106 = vmatpush2.bf16.msra.mxu0 0
  %1107 = vmatprep.subr.bf16.mxu0 0
  %1108 = vmatpush2.bf16.msra.mxu0 0
  %1109 = vmatprep.subr.bf16.mxu0 0
  %1110 = vmatpush2.bf16.msra.mxu0 0
  %1111 = vmatprep.subr.bf16.mxu0 0
  %1112 = vmatpush2.bf16.msra.mxu0 0
  %1113 = vmatprep.mubr.bf16.mxu0 0
  %1114 = vmatmul.mubr.bf16.gmra.mxu0 %v1009
  %v1115 = vpop.f32.mrf.mxu0
  %v1116 = vadd.f32 %v1031, %v1115
  %v1117 = vpop.f32.mrf.mxu0
  %v1118 = vpop.f32.mrf.mxu0
  %v1119 = vpop.f32.mrf.mxu0
  %1120 = vdwg.mxu0
  %v1121 = vmax.f32 %v1116, 0.0
  %v1122 = vpack.c.bf16 %v1121, %v1121
  %v1123 = vld [vmem:[%s7] sm:$0xf]
  %v1124 = vld [vmem:[%s7 + $0x4] sm:$0xf]
  %v1125 = vld [vmem:[%s7 + $0x8] sm:$0xf]
  %v1126 = vld [vmem:[%s7 + $0xc] sm:$0xf]
  %v1127 = vld [vmem:[%s7 + $0x10] sm:$0xf]
  %v1128 = vld [vmem:[%s7 + $0x14] sm:$0xf]
  %v1129 = vld [vmem:[%s7 + $0x18] sm:$0xf]
  %v1130 = vld [vmem:[%s7 + $0x1c] sm:$0xf]
  %v1131 = vld [vmem:[%s7 + $0x20] sm:$0xf]
  %v1132 = vld [vmem:[%s7 + $0x24] sm:$0xf]
  %v1133 = vld [vmem:[%s7 + $0x28] sm:$0xf]
  %v1134 = vld [vmem:[%s7 + $0x2c] sm:$0xf]
  %v1135 = vld [vmem:[%s7 + $0x30] sm:$0xf]
  %v1136 = vld [vmem:[%s7 + $0x34] sm:$0xf]
  %v1137 = vld [vmem:[%s7 + $0x38] sm:$0xf]
  %v1138 = vld [vmem:[%s7 + $0x3c] sm:$0xf]
  %v1139 = vld [vmem:[%s8] sm:$0x1]
  %v1141 = vlaneseq
  %v1142 = vshrl.u32 %v1141, 7
  %v1143 = vsub.s32 0, %v1142
  %v1144 = vrot.slane %v1139, %v1143
  %v1162 = vunpack.c.l.b16 %v1123
  %v1163 = vunpack.c.l.b16 %v1124
  %v1164 = vunpack.c.l.b16 %v1125
  %v1165 = vunpack.c.l.b16 %v1126
  %v1166 = vunpack.c.l.b16 %v1127
  %v1167 = vunpack.c.l.b16 %v1128
  %v1168 = vunpack.c.l.b16 %v1129
  %v1169 = vunpack.c.l.b16 %v1130
  %v1170 = vunpack.c.l.b16 %v1131
  %v1171 = vunpack.c.l.b16 %v1132
  %v1172 = vunpack.c.l.b16 %v1133
  %v1173 = vunpack.c.l.b16 %v1134
  %v1174 = vunpack.c.l.b16 %v1135
  %v1175 = vunpack.c.l.b16 %v1136
  %v1176 = vunpack.c.l.b16 %v1137
  %v1177 = vunpack.c.l.b16 %v1138
  %v1178 = vpack.c.b16 %v1163, %v1162
  %v1179 = vpack.c.b16 %v1165, %v1164
  %v1180 = vpack.c.b16 %v1167, %v1166
  %v1181 = vpack.c.b16 %v1169, %v1168
  %v1182 = vpack.c.b16 %v1171, %v1170
  %v1183 = vpack.c.b16 %v1173, %v1172
  %v1184 = vpack.c.b16 %v1175, %v1174
  %v1185 = vpack.c.b16 %v1177, %v1176
  %1194 = vmatprep.subr.bf16.mxu0 0
  %1195 = vmatpush1.bf16.msra.mxu0 %v1185
  %1196 = vmatprep.subr.bf16.mxu0 0
  %1197 = vmatpush1.bf16.msra.mxu0 %v1184
  %1198 = vmatprep.subr.bf16.mxu0 0
  %1199 = vmatpush1.bf16.msra.mxu0 %v1183
  %1200 = vmatprep.subr.bf16.mxu0 0
  %1201 = vmatpush1.bf16.msra.mxu0 %v1182
  %1202 = vmatprep.subr.bf16.mxu0 0
  %1203 = vmatpush1.bf16.msra.mxu0 %v1181
  %1204 = vmatprep.subr.bf16.mxu0 0
  %1205 = vmatpush1.bf16.msra.mxu0 %v1180
  %1206 = vmatprep.subr.bf16.mxu0 0
  %1207 = vmatpush1.bf16.msra.mxu0 %v1179
  %1208 = vmatprep.subr.bf16.mxu0 0
  %1209 = vmatpush1.bf16.msra.mxu0 %v1178
  %1210 = vmatprep.subr.bf16.mxu0 0
  %1211 = vmatpush2.bf16.msra.mxu0 0
  %1212 = vmatprep.subr.bf16.mxu0 0
  %1213 = vmatpush2.bf16.msra.mxu0 0
  %1214 = vmatprep.subr.bf16.mxu0 0
  %1215 = vmatpush2.bf16.msra.mxu0 0
  %1216 = vmatprep.subr.bf16.mxu0 0
  %1217 = vmatpush2.bf16.msra.mxu0 0
  %1218 = vmatprep.subr.bf16.mxu0 0
  %1219 = vmatpush2.bf16.msra.mxu0 0
  %1220 = vmatprep.subr.bf16.mxu0 0
  %1221 = vmatpush2.bf16.msra.mxu0 0
  %1222 = vmatprep.subr.bf16.mxu0 0
  %1223 = vmatpush2.bf16.msra.mxu0 0
  %1224 = vmatprep.subr.bf16.mxu0 0
  %1225 = vmatpush2.bf16.msra.mxu0 0
  %1226 = vmatprep.mubr.bf16.mxu0 0
  %1227 = vmatmul.mubr.bf16.gmra.mxu0 %v1122
  %v1228 = vpop.f32.mrf.mxu0
  %v1229 = vadd.f32 %v1144, %v1228
  %v1230 = vpop.f32.mrf.mxu0
  %v1231 = vpop.f32.mrf.mxu0
  %v1232 = vpop.f32.mrf.mxu0
  %1233 = vdwg.mxu0
  %1234 = vmax.xlane.f32.xlu0 %v1229
  %v1235 = vpop.xlane.xlu0 %1234
  %v1236 = vsub.f32 %v1229, %v1235
  %v1237 = vmul.f32 %v1236, 1.442695
  %v1238 = vpow.pop %v1237
  %1239 = vadd.xlane.f32.xlu0 %v1238
  %v1240 = vpop.xlane.xlu0 %1239
  %v1241 = vlog2.pop %v1240
  %v1242 = vmul.f32 %v1241, 0.6931472
  %v1243 = vsub.f32 %v1236, %v1242
  %v1244 = vpack.c.bf16 %v1243, %v1243
  %1245 = vst [vmem:[%s9] sm:$0xf] %v1244
  // Predicated region
  $region38: #{classifier_forward.1} parent=0 // pred_check
    _
  $region39: #{classifier_forward.1} parent=0 // pred_check_branch
    %1247 = sbr.rel (0) target = $region41
  $region40: #{classifier_forward.1} parent=0 // pred_region
    _
  $region41: #{classifier_forward.1} parent=0 // pred_fallthru
    _
  // Predicated region
  $region42: #{classifier_forward.1} parent=0 // pred_check
    _
  $region43: #{classifier_forward.1} parent=0 // pred_check_branch
    %1249 = sbr.rel (0) target = $region45
  $region44: #{classifier_forward.1} parent=0 // pred_region
    _
  $region45: #{classifier_forward.1} parent=0 // pred_fallthru
    _

</llo_original>
